<compile_context>
chip_gen: v7x
topology: tpu7x:2x2x1
jax: 0.10.0
libtpu: 0.0.40
codegen_flags: <defaults>
</compile_context>

<pallas_src>
import jax
import jax.numpy as jnp
from jax.experimental import pallas as pl
from jax.experimental.pallas import tpu as pltpu


def _vmem_capacity_bytes():
    """Physical VMEM of the current chip; conservative default if unknown."""
    try:
        info = pltpu.get_tpu_info()
        cap = getattr(info, "vmem_capacity_bytes", None)
        if cap:
            return int(cap)
    except Exception:
        pass
    return 64 * 1024 * 1024  # v7x-sized conservative default


def _make_ce_kernel(T, S, TS):
    """Per-(batch, seq-tile) cross-entropy kernel. T, S, TS are static."""
    lo = T - S  # first "real" target position along x's time axis

    def _ce_kernel(tlen_ref, tgt_ref, x_ref, out_ref):
        # tlen_ref : SMEM (B,) int32          -- scalar prefetch (valid lens)
        # tgt_ref  : VMEM (1, TS, 1) int32    -- left-padded target ids
        # x_ref    : VMEM (1, TS, C)          -- logits tile (native dtype)
        # out_ref  : VMEM (1, 1, 1, 1) f32    -- per-batch loss accumulator
        b = pl.program_id(0)
        s = pl.program_id(1)

        @pl.when(s == 0)
        def _():
            out_ref[...] = jnp.zeros_like(out_ref)

        x_nat = x_ref[0]                                    # (TS, C) native
        tgt = tgt_ref[0]                                    # (TS, 1) int32
        ts, C = x_nat.shape

        # Row max on the native dtype (exact for bf16/f32); one shared f32
        # shifted tensor feeds both reductions -- no separate full f32 upcast
        # of the tile stays live.
        m = jnp.max(x_nat, axis=-1, keepdims=True).astype(jnp.float32)
        shifted = x_nat.astype(jnp.float32) - m             # (TS, C) f32
        sum_exp = jnp.sum(jnp.exp(shifted), axis=-1, keepdims=True)  # (TS, 1)

        cls_ids = jax.lax.broadcasted_iota(jnp.int32, (ts, C), 1)
        tgt_shift = jnp.sum(jnp.where(cls_ids == tgt, shifted, 0.0),
                            axis=-1, keepdims=True)         # (TS, 1)

        # -log_softmax(x)[target] per row; the m term cancels out.
        per_row = jnp.log(sum_exp) - tgt_shift               # (TS, 1)

        # Row validity: past the SOS prefix, within target_len[b], inside the
        # array (guards pad rows of the ragged last tile).  Keep as a select:
        # pad rows may hold arbitrary / non-finite block padding.
        row = jax.lax.broadcasted_iota(jnp.int32, (ts, 1), 0)
        g = s * TS + row
        valid = (g >= lo) & (g < lo + tlen_ref[b]) & (g < T)

        out_ref[0, 0] += jnp.sum(jnp.where(valid, per_row, 0.0), keepdims=True)

    return _ce_kernel


def cross_entropy_loss(x, target, target_len, num_classes):
    """Equivalent of CrossEntropyLoss.forward (sum reduction).

    x          : (B, SOS_len + seq_len, C) float (f32 or bf16, passed as-is)
    target     : (B, seq_len) int
    target_len : (B,) int
    """
    B, T, C = x.shape
    S = target.shape[1]
    assert C == num_classes and T >= S

    # Cheap glue on the *small* tensors only; the logits tensor is untouched.
    tgt = target.astype(jnp.int32)
    if T > S:
        tgt = jnp.concatenate([jnp.zeros((B, T - S), jnp.int32), tgt], axis=1)
    tgt3 = tgt[..., None]                       # (B, T, 1), aligned with x time axis
    tlen = target_len.astype(jnp.int32)         # (B,)

    # Generation-aware VMEM budget: ~60% of physical VMEM, capped at 96 MiB
    # (-> ~38 MiB on v7x's 64 MiB, ~77 MiB on v5e/v6e's 128 MiB).
    vmem_cap = _vmem_capacity_bytes()
    vmem_limit = min(int(vmem_cap * 0.6), 96 * 1024 * 1024)

    # Sequence-tile size from an explicit per-row VMEM cost model:
    #   2x double-buffered logits input rows (native dtype) + ~3 (TS, C)
    #   f32/int32 elementwise temporaries (shifted, exp, class-iota/select),
    # leaving ~4 MiB headroom for Mosaic internals.  Cap TS at 1024 rows.
    in_bytes = jnp.dtype(x.dtype).itemsize
    per_row_bytes = 2 * C * in_bytes + 3 * C * 4 + 64
    budget = max(vmem_limit - 4 * 1024 * 1024, per_row_bytes * 8)
    TS = max(8, min(1024, (budget // per_row_bytes) // 8 * 8))
    if TS >= T:
        TS = T  # block == full dim is always layout-legal
    NS = pl.cdiv(T, TS)

    partials = pl.pallas_call(
        _make_ce_kernel(T, S, TS),
        out_shape=jax.ShapeDtypeStruct((B, 1, 1, 1), jnp.float32),
        grid_spec=pltpu.PrefetchScalarGridSpec(
            num_scalar_prefetch=1,
            grid=(B, NS),
            in_specs=[
                pl.BlockSpec((1, TS, 1), lambda b, s, tl: (b, s, 0)),   # targets
                pl.BlockSpec((1, TS, C), lambda b, s, tl: (b, s, 0)),   # logits
            ],
            # Per-batch accumulator, resident across the (inner) seq axis:
            # one writeback per batch row instead of B*NS tiny stores.
            out_specs=pl.BlockSpec((1, 1, 1, 1), lambda b, s, tl: (b, 0, 0, 0)),
        ),
        compiler_params=pltpu.CompilerParams(
            dimension_semantics=("parallel", "arbitrary"),
            vmem_limit_bytes=vmem_limit,
        ),
    )(tlen, tgt3, x)

    return jnp.sum(partials)


def _reference(x, target, target_len, num_classes):
    S = target.shape[1]
    xs = x[:, -S:, :].astype(jnp.float32)
    logp = jax.nn.log_softmax(xs, axis=-1)
    one_hot = jax.nn.one_hot(target, num_classes, dtype=jnp.float32)
    pos = jnp.arange(S)[None, :] < target_len[:, None]
    return -jnp.sum(logp * one_hot * pos[..., None].astype(jnp.float32))


if __name__ == "__main__":
    B, SOS_LEN, SEQ_LEN, NUM_CLASSES = 2, 2, 8, 32
    key = jax.random.PRNGKey(0)
    kx, kt, kl = jax.random.split(key, 3)

    x = jax.random.normal(kx, (B, SOS_LEN + SEQ_LEN, NUM_CLASSES), dtype=jnp.float32)
    target = jax.random.randint(kt, (B, SEQ_LEN), 0, NUM_CLASSES, dtype=jnp.int32)
    target_len = jax.random.randint(kl, (B,), 1, SEQ_LEN + 1, dtype=jnp.int32)

    out = cross_entropy_loss(x, target, target_len, NUM_CLASSES)
    out = jax.block_until_ready(out)

    ref = _reference(x, target, target_len, NUM_CLASSES)
    assert jnp.allclose(out, ref, rtol=1e-5, atol=1e-5), (out, ref)
    print("KERNEL_OK")
</pallas_src>

<mosaic_0001>
module attributes {stable_mosaic.version = 11 : i64} {
  func.func @_ce_kernel(%arg0: i32, %arg1: i32, %arg2: memref<2xi32, #tpu.memory_space<smem>>, %arg3: memref<1x10x1xi32, #tpu.memory_space<vmem>>, %arg4: memref<1x10x32xf32, #tpu.memory_space<vmem>>, %arg5: memref<1x1x1x1xf32, #tpu.memory_space<vmem>>) attributes {dimension_semantics = [#tpu.dimension_semantics<parallel>, #tpu.dimension_semantics<arbitrary>], iteration_bounds = array<i64: 2, 1>, scalar_prefetch = 1 : i64, scratch_operands = 0 : i64, tpu.core_type = #tpu.core_type<tc>, window_params = [{transform_indices = @transform_0, window_bounds = array<i64: 1, 10, 1>}, {transform_indices = @transform_1, window_bounds = array<i64: 1, 10, 32>}, {transform_indices = @transform_2, window_bounds = array<i64: 1, 1, 1, 1>}]} {
    %c0_i32 = arith.constant 0 : i32
    %0 = arith.cmpi eq, %arg1, %c0_i32 : i32
    %1 = arith.extui %0 : i1 to i32
    %c0_i32_0 = arith.constant 0 : i32
    %2 = arith.cmpi ne, %1, %c0_i32_0 : i32
    scf.if %2 {
      %cst_21 = arith.constant 0.000000e+00 : f32
      %51 = vector.broadcast %cst_21 : f32 to vector<1x1x1x1xf32>
      %c0_22 = arith.constant 0 : index
      %c0_23 = arith.constant 0 : index
      %c0_24 = arith.constant 0 : index
      %c0_25 = arith.constant 0 : index
      %52 = vector.load %arg5[%c0_22, %c0_23, %c0_24, %c0_25] : memref<1x1x1x1xf32, #tpu.memory_space<vmem>>, vector<1x1x1x1xf32>
      tpu.vector_store %arg5[%c0_22, %c0_23, %c0_24, %c0_25], %51 {strides = array<i32>} : memref<1x1x1x1xf32, #tpu.memory_space<vmem>>, vector<1x1x1x1xf32>,
    } else {
    }
    %c0 = arith.constant 0 : index
    %c0_1 = arith.constant 0 : index
    %c0_2 = arith.constant 0 : index
    %3 = vector.load %arg4[%c0, %c0_1, %c0_2] : memref<1x10x32xf32, #tpu.memory_space<vmem>>, vector<1x10x32xf32>
    %4 = vector.shape_cast %3 : vector<1x10x32xf32> to vector<10x32xf32>
    %c0_3 = arith.constant 0 : index
    %c0_4 = arith.constant 0 : index
    %c0_5 = arith.constant 0 : index
    %5 = vector.load %arg3[%c0_3, %c0_4, %c0_5] : memref<1x10x1xi32, #tpu.memory_space<vmem>>, vector<1x10x1xi32>
    %6 = vector.shape_cast %5 : vector<1x10x1xi32> to vector<10x1xi32>
    %cst = arith.constant dense<0xFF800000> : vector<10xf32>
    %7 = vector.multi_reduction <maximumf>, %4, %cst [1] : vector<10x32xf32> to vector<10xf32>
    %8 = vector.shape_cast %7 : vector<10xf32> to vector<10x1xf32>
    %9 = vector.broadcast %8 : vector<10x1xf32> to vector<10x32xf32>
    %10 = arith.subf %4, %9 : vector<10x32xf32>
    %11 = math.exp %10 : vector<10x32xf32>
    %cst_6 = arith.constant dense<0.000000e+00> : vector<10xf32>
    %12 = vector.multi_reduction <add>, %11, %cst_6 [1] : vector<10x32xf32> to vector<10xf32>
    %13 = vector.shape_cast %12 : vector<10xf32> to vector<10x1xf32>
    %14 = tpu.iota {dimensions = array<i32: 1>} : vector<10x32xi32>
    %15 = vector.broadcast %6 : vector<10x1xi32> to vector<10x32xi32>
    %16 = arith.cmpi eq, %14, %15 : vector<10x32xi32>
    %cst_7 = arith.constant 0.000000e+00 : f32
    %17 = vector.broadcast %cst_7 : f32 to vector<10x32xf32>
    %18 = arith.select %16, %10, %17 : vector<10x32xi1>, vector<10x32xf32>
    %cst_8 = arith.constant dense<0.000000e+00> : vector<10xf32>
    %19 = vector.multi_reduction <add>, %18, %cst_8 [1] : vector<10x32xf32> to vector<10xf32>
    %20 = vector.shape_cast %19 : vector<10xf32> to vector<10x1xf32>
    %21 = math.log %13 : vector<10x1xf32>
    %22 = arith.subf %21, %20 : vector<10x1xf32>
    %23 = tpu.iota {dimensions = array<i32: 0>} : vector<10x1xi32>
    %c10_i32 = arith.constant 10 : i32
    %24 = arith.muli %arg1, %c10_i32 : i32
    %25 = vector.broadcast %24 : i32 to vector<10x1xi32>
    %26 = arith.addi %25, %23 : vector<10x1xi32>
    %c2_i32 = arith.constant 2 : i32
    %27 = vector.broadcast %c2_i32 : i32 to vector<10x1xi32>
    %28 = arith.cmpi sge, %26, %27 : vector<10x1xi32>
    %29 = arith.index_cast %arg0 : i32 to index
    %30 = memref.load %arg2[%29] : memref<2xi32, #tpu.memory_space<smem>>
    %c2_i32_9 = arith.constant 2 : i32
    %31 = arith.addi %c2_i32_9, %30 : i32
    %32 = vector.broadcast %31 : i32 to vector<10x1xi32>
    %33 = arith.cmpi slt, %26, %32 : vector<10x1xi32>
    %34 = arith.andi %28, %33 : vector<10x1xi1>
    %c10_i32_10 = arith.constant 10 : i32
    %35 = vector.broadcast %c10_i32_10 : i32 to vector<10x1xi32>
    %36 = arith.cmpi slt, %26, %35 : vector<10x1xi32>
    %37 = arith.andi %34, %36 : vector<10x1xi1>
    %c0_11 = arith.constant 0 : index
    %c0_12 = arith.constant 0 : index
    %c0_13 = arith.constant 0 : index
    %c0_14 = arith.constant 0 : index
    %38 = vector.load %arg5[%c0_11, %c0_12, %c0_13, %c0_14] : memref<1x1x1x1xf32, #tpu.memory_space<vmem>>, vector<1x1x1x1xf32>
    %39 = vector.shape_cast %38 : vector<1x1x1x1xf32> to vector<1x1xf32>
    %cst_15 = arith.constant 0.000000e+00 : f32
    %40 = vector.broadcast %cst_15 : f32 to vector<10x1xf32>
    %41 = arith.select %37, %22, %40 : vector<10x1xi1>, vector<10x1xf32>
    %42 = vector.shape_cast %41 : vector<10x1xf32> to vector<1x10x1xf32>
    %cst_16 = arith.constant dense<0.000000e+00> : vector<1xf32>
    %43 = vector.multi_reduction <add>, %42, %cst_16 [1, 2] : vector<1x10x1xf32> to vector<1xf32>
    %44 = vector.shape_cast %43 : vector<1xf32> to vector<1x1x1xf32>
    %45 = vector.extract %44[0, 0, 0] : f32 from vector<1x1x1xf32>
    %46 = vector.broadcast %45 : f32 to vector<1x1xf32>
    %47 = arith.addf %39, %46 : vector<1x1xf32>
    %c0_17 = arith.constant 0 : index
    %c0_18 = arith.constant 0 : index
    %c0_19 = arith.constant 0 : index
    %c0_20 = arith.constant 0 : index
    %48 = vector.load %arg5[%c0_17, %c0_18, %c0_19, %c0_20] : memref<1x1x1x1xf32, #tpu.memory_space<vmem>>, vector<1x1x1x1xf32>
    %49 = vector.shape_cast %48 : vector<1x1x1x1xf32> to vector<1x1xf32>
    %50 = vector.shape_cast %47 : vector<1x1xf32> to vector<1x1x1x1xf32>
    tpu.vector_store %arg5[%c0_17, %c0_18, %c0_19, %c0_20], %50 {strides = array<i32>} : memref<1x1x1x1xf32, #tpu.memory_space<vmem>>, vector<1x1x1x1xf32>,
    return
  }
  func.func @transform_0(%arg0: i32, %arg1: i32, %arg2: memref<2xi32, #tpu.memory_space<smem>>) -> (i32, i32, i32) {
    %c0_i32 = arith.constant 0 : i32
    %c0_i32_0 = arith.constant 0 : i32
    return %arg0, %arg1, %c0_i32 : i32, i32, i32
  }
  func.func @transform_1(%arg0: i32, %arg1: i32, %arg2: memref<2xi32, #tpu.memory_space<smem>>) -> (i32, i32, i32) {
    %c0_i32 = arith.constant 0 : i32
    %c0_i32_0 = arith.constant 0 : i32
    return %arg0, %arg1, %c0_i32 : i32, i32, i32
  }
  func.func @transform_2(%arg0: i32, %arg1: i32, %arg2: memref<2xi32, #tpu.memory_space<smem>>) -> (i32, i32, i32, i32) {
    %c0_i32 = arith.constant 0 : i32
    %c0_i32_0 = arith.constant 0 : i32
    %c0_i32_1 = arith.constant 0 : i32
    %c0_i32_2 = arith.constant 0 : i32
    return %arg0, %c0_i32, %c0_i32_0, %c0_i32_1 : i32, i32, i32, i32
  }
}

</mosaic_0001>

<llo_original>
// kernel: tpu_custom_call.1
$region0: #{tpu_custom_call.1}
  #allocation0 [shape = 'u32[]', space=smem, size = 0x4, offset = 0x4, fixed_abs, tag = 'smem constant byte address 0x4 - core index']
  #allocation1 [shape = 'u32[144,128]{1,0:T(1,128)}', space=vmem, size = 0x12000, scoped, tag = 'internal scratch']
  #allocation2 [shape = 's32[1]{0}', space=sflag, size = 0x4, scoped, tag = 'scoped memory for tpu_custom_call.1']
  #allocation3 [shape = 'u8[512]{0}', space=smem, size = 0x200, scoped, tag = 'prefetched SMEM operand 0']
  %s0 = inlined_call_operand.vmem [shape: s32[2], index: 0, kind: input, shape index: {}]
  %s1 = inlined_call_operand.vmem [shape: s32[2,10,1], index: 1, kind: input, shape index: {}]
  %s2 = inlined_call_operand.vmem [shape: f32[2,10,32], index: 2, kind: input, shape index: {}]
  %s3 = inlined_call_operand.vmem [shape: f32[2,1,1,1], index: 3, kind: output, shape index: {}]
  %s4 = sld [smem:[#allocation0]]
  $region45: #{tpu_custom_call.1} parent=0
    _
  %s6 = ssub.s32 1, %s4
  %s7 = scalar_select 0, %s6, %s4
  %s8 = sshll.u32 %s0, 4
  %s9 = int_to_ptr.vmem [resolvable:$true] %s8
  %11 = dma.vmem_to_smem %s9, 16, [#allocation3], [#allocation2]
  %12 = dma.done [#allocation2], 16
  %13 = sfence
  loop: start=0, step=1, limit=4
  $region2: #{tpu_custom_call.1} parent=0 // loop_pre_header
    _
  $region3: #{tpu_custom_call.1} parent=0 // loop_header
    %s15 = sphi 0, %s19
    %p16 = scmp.ge.s32.totalorder %s15, 4
    %s22 = sphi 0, %s34
    %s23 = sphi 0, %s30
    %s24 = sphi 0, %s22
    %s25 = sphi 0, %s23
    %s26 = sphi 0, %s24
    %s27 = sphi 0, %s25
    %s39 = sphi 0, %s41
    %s42 = sphi 0, %s39
    %s43 = sphi 0, %s42
    %s59 = sphi 0, %s43
    %s67 = sphi 0, %s69
    %s70 = sphi 0, %s67
    %s71 = sphi 0, %s70
    %s87 = sphi 0, %s71
    %s93 = sphi 0, %s95
    %s96 = sphi 0, %s93
    %s97 = sphi 0, %s96
    %s113 = sphi 0, %s97
  $region4: #{tpu_custom_call.1} parent=0 // loop_header_branch
    %18 = sbr.rel (%p16) target = $region8
  $region5: #{tpu_custom_call.1} parent=0 // loop_body
    %s20 = ssub.s32 %s15, 1
    %s21 = ssub.s32 %s15, 2
    %s28 = sadd.s32 1, %s23
    %p29 = scmp.ge.s32.totalorder %s28, 1
    %s30 = scalar_select %p29, 0, %s28
    %s31 = sadd.s32 1, %s22
    %s32 = scalar_select %p29, %s31, %s22
    %p33 = scmp.ge.s32.totalorder %s32, 2
    %s34 = scalar_select %p33, 0, %s32
    %s35 = ssub.s32 %s22, %s34
    %s36 = ssub.s32 %s23, %s30
    %s37 = sor.u32 %s35, %s36
    %p38 = scmp.eq.s32.totalorder %s37, 0
    %s40 = sadd.s32 %s39, 1
    %s41 = scalar_select %p38, %s39, %s40
    %p44 = pneg %p38
    %p45 = scmp.eq.s32.totalorder %s15, 1
    %p46 = por %p44, %p45
    %p47 = scmp.ne.s32.totalorder %s39, %s42
    %p48 = scmp.eq.s32.totalorder %s15, 0
    %p49 = por %p47, %p48
    %p50 = scmp.ne.s32.totalorder %s39, %s42
    %p51 = scmp.eq.s32.totalorder %s20, 1
    %p52 = por %p50, %p51
    %p53 = scmp.ne.s32.totalorder %s42, %s43
    %p54 = scmp.eq.s32.totalorder %s20, 0
    %p55 = por %p53, %p54
    %p56 = scmp.ne.s32.totalorder %s42, %s43
    %p57 = scmp.eq.s32.totalorder %s21, 1
    %p58 = por %p56, %p57
    %p60 = scmp.ne.s32.totalorder %s43, %s59
    %p61 = scmp.eq.s32.totalorder %s21, 0
    %p62 = por %p60, %p61
    %s63 = ssub.s32 %s22, %s34
    %s64 = ssub.s32 %s23, %s30
    %s65 = sor.u32 %s63, %s64
    %p66 = scmp.eq.s32.totalorder %s65, 0
    %s68 = sadd.s32 %s67, 1
    %s69 = scalar_select %p66, %s67, %s68
    %p72 = pneg %p66
    %p73 = scmp.eq.s32.totalorder %s15, 1
    %p74 = por %p72, %p73
    %p75 = scmp.ne.s32.totalorder %s67, %s70
    %p76 = scmp.eq.s32.totalorder %s15, 0
    %p77 = por %p75, %p76
    %p78 = scmp.ne.s32.totalorder %s67, %s70
    %p79 = scmp.eq.s32.totalorder %s20, 1
    %p80 = por %p78, %p79
    %p81 = scmp.ne.s32.totalorder %s70, %s71
    %p82 = scmp.eq.s32.totalorder %s20, 0
    %p83 = por %p81, %p82
    %p84 = scmp.ne.s32.totalorder %s70, %s71
    %p85 = scmp.eq.s32.totalorder %s21, 1
    %p86 = por %p84, %p85
    %p88 = scmp.ne.s32.totalorder %s71, %s87
    %p89 = scmp.eq.s32.totalorder %s21, 0
    %p90 = por %p88, %p89
    %s91 = ssub.s32 %s22, %s34
    %p92 = scmp.eq.s32.totalorder %s91, 0
    %s94 = sadd.s32 %s93, 1
    %s95 = scalar_select %p92, %s93, %s94
    %p98 = pneg %p92
    %p99 = scmp.eq.s32.totalorder %s15, 1
    %p100 = por %p98, %p99
    %p101 = scmp.ne.s32.totalorder %s93, %s96
    %p102 = scmp.eq.s32.totalorder %s15, 0
    %p103 = por %p101, %p102
    %p104 = scmp.ne.s32.totalorder %s93, %s96
    %p105 = scmp.eq.s32.totalorder %s20, 1
    %p106 = por %p104, %p105
    %p107 = scmp.ne.s32.totalorder %s96, %s97
    %p108 = scmp.eq.s32.totalorder %s20, 0
    %p109 = por %p107, %p108
    %p110 = scmp.ne.s32.totalorder %s96, %s97
    %p111 = scmp.eq.s32.totalorder %s21, 1
    %p112 = por %p110, %p111
    %p114 = scmp.ne.s32.totalorder %s97, %s113
    %p115 = scmp.eq.s32.totalorder %s21, 0
    %p116 = por %p114, %p115
    %p117 = scmp.le.s32.totalorder 1, %s15
    %p118 = scmp.lt.s32.totalorder %s15, 3
    %p119 = pnand %p117, %p118
    %p120 = pneg %p119
    // Predicated region
    $region9: #{tpu_custom_call.1} parent=5 // pred_check
      _
    $region10: #{tpu_custom_call.1} parent=5 // pred_check_branch
      %122 = sbr.rel (%p119) target = $region12
    $region11: #{tpu_custom_call.1} parent=5 // pred_region
      %s123 = ssub.s32 %s15, 1
    $region12: #{tpu_custom_call.1} parent=5 // pred_fallthru
      _
    %p124 = scmp.lt.s32.totalorder %s15, 2
    // Predicated region
    $region13: #{tpu_custom_call.1} parent=5 // pred_check
      %p125 = pneg %p124
    $region14: #{tpu_custom_call.1} parent=5 // pred_check_branch
      %127 = sbr.rel (%p125) target = $region16
    $region15: #{tpu_custom_call.1} parent=5 // pred_region
      // Predicated region
      $region17: #{tpu_custom_call.1} parent=15 // pred_check
        %p128 = pneg %p49
      $region18: #{tpu_custom_call.1} parent=15 // pred_check_branch
        %130 = sbr.rel (%p128) target = $region20
      $region19: #{tpu_custom_call.1} parent=15 // pred_region
        %s131 = smul.u32 2, %s23
        %p132 = scmp.lt.s32.totalorder %s22, 1
        %s133 = scalar_select %p132, %s22, 1
        %p134 = scmp.lt.s32.totalorder %s131, 1
        %s135 = scalar_select %p134, %s131, 1
        %s136 = smul.addr %s133, 2
        %s137 = sadd.s32 %s135, %s136
        %s138 = smul.addr %s137, 8
        %s139 = scalar_lea.vmem %s1, %s138
        %s140 = smul.u32 2, %s23
      $region20: #{tpu_custom_call.1} parent=15 // pred_fallthru
        _
      // Predicated region
      $region21: #{tpu_custom_call.1} parent=15 // pred_check
        %p141 = pneg %p77
      $region22: #{tpu_custom_call.1} parent=15 // pred_check_branch
        %143 = sbr.rel (%p141) target = $region24
      $region23: #{tpu_custom_call.1} parent=15 // pred_region
        %s144 = smul.u32 2, %s23
        %p145 = scmp.lt.s32.totalorder %s22, 1
        %s146 = scalar_select %p145, %s22, 1
        %p147 = scmp.lt.s32.totalorder %s144, 1
        %s148 = scalar_select %p147, %s144, 1
        %s149 = smul.addr %s146, 2
        %s150 = sadd.s32 %s148, %s149
        %s151 = smul.addr %s150, 8
        %s152 = scalar_lea.vmem %s2, %s151
        %s153 = smul.u32 2, %s23
      $region24: #{tpu_custom_call.1} parent=15 // pred_fallthru
        _
    $region16: #{tpu_custom_call.1} parent=5 // pred_fallthru
      _
    %p154 = scmp.le.s32.totalorder 1, %s15
    %p155 = scmp.lt.s32.totalorder %s15, 3
    %p156 = pnand %p154, %p155
    %p157 = pneg %p156
    // Predicated region
    $region25: #{tpu_custom_call.1} parent=5 // pred_check
      _
    $region26: #{tpu_custom_call.1} parent=5 // pred_check_branch
      %159 = sbr.rel (%p156) target = $region28
    $region27: #{tpu_custom_call.1} parent=5 // pred_region
      %s160 = ssub.s32 %s15, 1
      %s161 = smul.u32 2, %s25
      %p162 = scmp.lt.s32.totalorder %s24, 1
      %s163 = scalar_select %p162, %s24, 1
      %p164 = scmp.lt.s32.totalorder %s161, 1
      %s165 = scalar_select %p164, %s161, 1
      %s166 = smul.addr %s163, 2
      %s167 = sadd.s32 %s165, %s166
      %s168 = smul.addr %s167, 8
      %s169 = scalar_lea.vmem %s1, %s168
      %p170 = pneg %p55
      %p171 = pneg %p52
      %s172 = smul.u32 2, %s25
      %p173 = scmp.lt.s32.totalorder %s24, 1
      %s174 = scalar_select %p173, %s24, 1
      %p175 = scmp.lt.s32.totalorder %s172, 1
      %s176 = scalar_select %p175, %s172, 1
      %s177 = smul.addr %s174, 2
      %s178 = sadd.s32 %s176, %s177
      %s179 = smul.addr %s178, 8
      %s180 = scalar_lea.vmem %s2, %s179
      %p181 = pneg %p83
      %p182 = pneg %p80
      %p183 = pneg %p109
      %p184 = pneg %p106
      %p185 = scmp.lt.s32.totalorder %s24, 1
      %s186 = scalar_select %p185, %s24, 1
      %s187 = scalar_lea.vmem %s3, %s186
      %s188 = smul.u32 2, %s25
      %p189 = scmp.lt.s32.totalorder %s24, 1
      %s190 = scalar_select %p189, %s24, 1
      %p191 = scmp.lt.s32.totalorder %s188, 1
      %s192 = scalar_select %p191, %s188, 1
      %s193 = smul.addr %s190, 2
      %s194 = sadd.s32 %s192, %s193
      %s195 = smul.addr %s194, 8
      %s196 = scalar_lea.vmem %s1, %s195
      %s197 = smul.u32 2, %s25
      %s198 = smul.u32 2, %s25
      %p199 = scmp.lt.s32.totalorder %s24, 1
      %s200 = scalar_select %p199, %s24, 1
      %p201 = scmp.lt.s32.totalorder %s198, 1
      %s202 = scalar_select %p201, %s198, 1
      %s203 = smul.addr %s200, 2
      %s204 = sadd.s32 %s202, %s203
      %s205 = smul.addr %s204, 8
      %s206 = scalar_lea.vmem %s2, %s205
      %s207 = smul.u32 2, %s25
      %p208 = scmp.lt.s32.totalorder %s24, 1
      %s209 = scalar_select %p208, %s24, 1
      %s210 = scalar_lea.vmem %s3, %s209
      %p211 = scmp.eq.s32.totalorder %s25, 0
      // Predicated region
      $region29: #{tpu_custom_call.1} parent=27 // pred_check
        %p212 = pneg %p211
      $region30: #{tpu_custom_call.1} parent=27 // pred_check_branch
        %214 = sbr.rel (%p212) target = $region32
      $region31: #{tpu_custom_call.1} parent=27 // pred_region
        %vm215 = vcmask 0
        %216 = vst.msk [vmem:[%s210] sm:$0x1] %vm215, 0.0
      $region32: #{tpu_custom_call.1} parent=27 // pred_fallthru
        _
      %v217 = vld [vmem:[%s206] sm:$0xff]
      %v218 = vld [vmem:[%s206 + $0x8] sm:$0x3]
      %v219 = vld [vmem:[%s196] sm:$0xff]
      %v220 = vld [vmem:[%s196 + $0x8] sm:$0x3]
      %vm221 = vcmask 261120
      %v222 = vsel %vm221, %v217, -inf
      %223 = vmax.xlane.f32.xlu0 %v222
      %v224 = vpop.xlane.xlu0 %223
      %vm225 = vcmask 254976
      %v226 = vsel %vm225, %v218, -inf
      %227 = vmax.xlane.f32.xlu0 %v226
      %v228 = vpop.xlane.xlu0 %227
      %v229 = vsub.f32 %v217, %v224
      %v230 = vsub.f32 %v218, %v228
      %v231 = vmul.f32 %v229, 1.442695
      %v232 = vpow.pop %v231
      %v233 = vmul.f32 %v230, 1.442695
      %v234 = vpow.pop %v233
      %v235 = vsel %vm221, %v232, 0.0
      %236 = vadd.xlane.f32.xlu0 %v235
      %v237 = vpop.xlane.xlu0 %236
      %v238 = vsel %vm225, %v234, 0.0
      %239 = vadd.xlane.f32.xlu0 %v238
      %v240 = vpop.xlane.xlu0 %239
      %v241 = vlaneseq
      %v242 = vand.u32 %v241, 127
      %243 = vset.pattern.permute.xlu0 0
      %244 = vperm.xlu0 %243, %v219
      %v245 = vpop.permute.xlu0 %244
      %246 = vset.pattern.permute.xlu0 0
      %247 = vperm.xlu0 %246, %v220
      %v248 = vpop.permute.xlu0 %247
      %vm249 = vcmp.eq.s32.totalorder %v242, %v245
      %vm250 = vcmp.eq.s32.totalorder %v242, %v248
      %v251 = vsel %vm249, %v229, 0.0
      %v252 = vsel %vm250, %v230, 0.0
      %v253 = vsel %vm221, %v251, 0.0
      %254 = vadd.xlane.f32.xlu0 %v253
      %v255 = vpop.xlane.xlu0 %254
      %v256 = vsel %vm225, %v252, 0.0
      %257 = vadd.xlane.f32.xlu0 %v256
      %v258 = vpop.xlane.xlu0 %257
      %v259 = vlog2.pop %v237
      %v260 = vmul.f32 %v259, 0.6931472
      %v261 = vlog2.pop %v240
      %v262 = vmul.f32 %v261, 0.6931472
      %v263 = vsub.f32 %v260, %v255
      %v264 = vsub.f32 %v262, %v258
      %v265 = vlaneseq
      %v266 = vshrl.u32 %v265, 7
      %v267 = vadd.s32 %v266, 8
      %s268 = smul.u32 %s25, 10
      %v269 = vstv %s268
      %v270 = vadd.s32 %v269, %v266
      %v271 = vadd.s32 %v269, %v267
      %vm272 = vcmp.ge.s32.totalorder %v270, 2
      %vm273 = vcmp.ge.s32.totalorder %v271, 2
      %s274 = sld [smem:[#allocation3 + %s24]]
      %s275 = sadd.s32 %s274, 2
      %v276 = vstv %s275
      %vm277 = vcmp.lt.s32.totalorder %v270, %v276
      %vm278 = vcmp.lt.s32.totalorder %v271, %v276
      %vm279 = vmand %vm272, %vm277
      %vm280 = vmand %vm273, %vm278
      %vm281 = vcmp.lt.s32.totalorder %v270, 10
      %vm282 = vcmp.lt.s32.totalorder %v271, 10
      %vm283 = vmand %vm279, %vm281
      %vm284 = vmand %vm280, %vm282
      %v285 = vld [vmem:[%s210] sm:$0x1]
      %v286 = vsel %vm283, %v263, 0.0
      %v287 = vsel %vm284, %v264, 0.0
      %vm288 = vcmask 7168
      %v289 = vsel %vm288, %v286, 0.0
      %vm290 = vcmask 1024
      %v291 = vsel %vm290, %v287, 0.0
      %v292 = vadd.f32 %v289, %v291
      %293 = vadd.xlane.f32.xlu0 %v292
      %v294 = vpop.xlane.xlu0 %293
      %v295 = vrot.slane %v294, 4
      %v296 = vadd.f32 %v294, %v295
      %v297 = vrot.slane %v296, 2
      %v298 = vadd.f32 %v296, %v297
      %v299 = vrot.slane %v298, 1
      %v300 = vadd.f32 %v298, %v299
      %s301 = vtos %v300
      %v302 = vstv %s301
      %v303 = vadd.f32 %v285, %v302
      %vm304 = vcmask 0
      %305 = vst.msk [vmem:[%s210] sm:$0x1] %vm304, %v303
      %p306 = scmp.lt.s32.totalorder %s24, 1
      %s307 = scalar_select %p306, %s24, 1
      %s308 = scalar_lea.vmem %s3, %s307
      // Predicated region
      $region33: #{tpu_custom_call.1} parent=27 // pred_check
        %p309 = pneg %p106
      $region34: #{tpu_custom_call.1} parent=27 // pred_check_branch
        %311 = sbr.rel (%p309) target = $region36
      $region35: #{tpu_custom_call.1} parent=27 // pred_region
        _
      $region36: #{tpu_custom_call.1} parent=27 // pred_fallthru
        _
    $region28: #{tpu_custom_call.1} parent=5 // pred_fallthru
      _
    %p312 = scmp.le.s32.totalorder 2, %s15
    // Predicated region
    $region37: #{tpu_custom_call.1} parent=5 // pred_check
      %p313 = pneg %p312
    $region38: #{tpu_custom_call.1} parent=5 // pred_check_branch
      %315 = sbr.rel (%p313) target = $region40
    $region39: #{tpu_custom_call.1} parent=5 // pred_region
      %s316 = ssub.s32 %s15, 2
      // Predicated region
      $region41: #{tpu_custom_call.1} parent=39 // pred_check
        %p317 = pneg %p112
      $region42: #{tpu_custom_call.1} parent=39 // pred_check_branch
        %319 = sbr.rel (%p317) target = $region44
      $region43: #{tpu_custom_call.1} parent=39 // pred_region
        %p320 = scmp.lt.s32.totalorder %s26, 1
        %s321 = scalar_select %p320, %s26, 1
        %s322 = scalar_lea.vmem %s3, %s321
      $region44: #{tpu_custom_call.1} parent=39 // pred_fallthru
        _
    $region40: #{tpu_custom_call.1} parent=5 // pred_fallthru
      _
  $region6: #{tpu_custom_call.1} parent=0 // loop_footer
    %s19 = sadd.s32 1, %s15
  $region7: #{tpu_custom_call.1} parent=0 // loop_footer_branch
    %14 = sbr.rel target = $region3
  $region8: #{tpu_custom_call.1} parent=0 // loop_exit
    _

</llo_original>
